<compile_context>
chip_gen: v7x
topology: tpu7x:2x2x1
jax: 0.10.0
libtpu: 0.0.40
codegen_flags: <defaults>
</compile_context>

<pallas_src>
import jax
import jax.numpy as jnp
from jax.experimental import pallas as pl
from jax.experimental.pallas import tpu as pltpu


def _round_up(x, m):
    return (x + m - 1) // m * m


def _choose_tm(M, per_row_bytes, *, vmem_budget_bytes=8 << 20, target_steps=8):
    """Pick the M row-tile.

    - Large enough to amortize the ~0.35 us per-grid-step overhead.
    - Small enough that double-buffered x + out tiles stay within
      `vmem_budget_bytes` (<= 8 MiB => fits the default scoped VMEM on
      v5e/v6e/v7x, no vmem_limit_bytes override needed).
    - Small enough that the grid has >= `target_steps` steps so the
      "parallel" M axis actually feeds both TensorCores on v7x.
    """
    budget_tm = max(8, (vmem_budget_bytes // per_row_bytes) // 8 * 8)
    steps_tm = _round_up(-(-M // target_steps), 8)       # ceil(M/steps), sublane-aligned
    tm = max(8, min(budget_tm, steps_tm))
    if tm >= M:
        return M          # single full-extent block (valid for any M, even M % 8 != 0)
    return tm             # multiple of 8; ragged tail handled by Pallas boundary blocks


def _linear_kernel(x_ref, w_ref, b_ref, o_ref):
    # x_ref: (tm, U) in x dtype; w_ref: (U, n_tags) bf16; b_ref: (1, n_tags) f32
    # o_ref: (tm, n_tags) in x dtype.
    x = x_ref[...]
    if x.dtype != w_ref.dtype:
        x = x.astype(w_ref.dtype)          # no-op if caller already supplies bf16
    acc = jnp.dot(x, w_ref[...], preferred_element_type=jnp.float32)
    o_ref[...] = (acc + b_ref[...]).astype(o_ref.dtype)


def dar_rnn_forward(x, hidden, weight, bias, *, compute_dtype=jnp.bfloat16):
    """x: (B, T, U); weight: (n_tags, U); bias: (n_tags,).

    Returns (decoded (B, T, n_tags), hidden) matching SimpleDARRNN.forward.
    """
    B, T, U = x.shape
    n_tags = weight.shape[0]
    M = B * T
    out_dtype = x.dtype

    x2d = x.reshape(M, U)                                   # contiguous view — free
    w_t = weight.T.astype(compute_dtype)                    # (U, n_tags), tiny, resident
    b2d = bias.astype(jnp.float32).reshape(1, n_tags)       # (1, n_tags), resident

    x_bytes = jnp.dtype(x.dtype).itemsize
    o_bytes = jnp.dtype(out_dtype).itemsize
    w_bytes = jnp.dtype(compute_dtype).itemsize
    per_row_bytes = 2 * (U * x_bytes + n_tags * o_bytes)    # double-buffered x + out tiles
    tm = _choose_tm(M, per_row_bytes)
    grid_m = pl.cdiv(M, tm)

    cost = pl.CostEstimate(
        flops=2 * M * U * n_tags,
        transcendentals=0,
        bytes_accessed=M * U * x_bytes + U * n_tags * w_bytes
        + n_tags * 4 + M * n_tags * o_bytes,
    )

    decoded2d = pl.pallas_call(
        _linear_kernel,
        out_shape=jax.ShapeDtypeStruct((M, n_tags), out_dtype),
        grid=(grid_m,),
        in_specs=[
            pl.BlockSpec((tm, U), lambda i: (i, 0)),        # streamed x tile
            pl.BlockSpec((U, n_tags), lambda i: (0, 0)),    # resident weight (full array)
            pl.BlockSpec((1, n_tags), lambda i: (0, 0)),    # resident bias row
        ],
        out_specs=pl.BlockSpec((tm, n_tags), lambda i: (i, 0)),  # true-width output
        compiler_params=pltpu.CompilerParams(
            dimension_semantics=("parallel",),   # shards M across TCs on v7x
        ),
        cost_estimate=cost,
    )(x2d, w_t, b2d)

    decoded = decoded2d.reshape(B, T, n_tags)
    return decoded, hidden


if __name__ == "__main__":
    # Small shapes consistent with the module's forward: x is (batch, seq, utt_size).
    batch, seq, utt_size, n_tags = 2, 8, 32, 16

    key = jax.random.PRNGKey(0)
    kx, kw, kb = jax.random.split(key, 3)

    x = jax.random.normal(kx, (batch, seq, utt_size), dtype=jnp.float32)
    # Deterministic parameter init (PyTorch Linear-style uniform bound).
    bound = 1.0 / (utt_size ** 0.5)
    weight = jax.random.uniform(kw, (n_tags, utt_size), jnp.float32, -bound, bound)
    bias = jax.random.uniform(kb, (n_tags,), jnp.float32, -bound, bound)

    # init_hidden returns an empty tensor in the PyTorch module; mirror that.
    hidden = jnp.zeros((0,), dtype=jnp.float32)

    decoded, hidden_out = dar_rnn_forward(x, hidden, weight, bias)
    decoded = jax.block_until_ready(decoded)

    # Reference checks in plain JAX.
    x2d = x.reshape(batch * seq, utt_size)
    # bf16-consistent reference (matches the kernel's MXU bf16 inputs, f32 accum).
    ref_bf16 = (
        x2d.astype(jnp.bfloat16).astype(jnp.float32)
        @ weight.astype(jnp.bfloat16).astype(jnp.float32).T
        + bias
    ).reshape(batch, seq, n_tags)
    # Full-precision reference (loose sanity bound).
    ref_f32 = (x2d @ weight.T + bias).reshape(batch, seq, n_tags)

    assert decoded.shape == (batch, seq, n_tags)
    assert decoded.dtype == x.dtype
    assert hidden_out.shape == hidden.shape
    assert jnp.allclose(decoded, ref_bf16, atol=1e-4, rtol=1e-4)
    assert jnp.allclose(decoded, ref_f32, atol=2e-2, rtol=2e-2)

    print("KERNEL_OK")
</pallas_src>

<mosaic_0001>
module attributes {stable_mosaic.version = 11 : i64} {
  func.func @_linear_kernel(%arg0: i32, %arg1: memref<8x32xf32, #tpu.memory_space<vmem>>, %arg2: memref<32x16xbf16, #tpu.memory_space<vmem>>, %arg3: memref<1x16xf32, #tpu.memory_space<vmem>>, %arg4: memref<8x16xf32, #tpu.memory_space<vmem>>) attributes {dimension_semantics = [#tpu.dimension_semantics<parallel>], iteration_bounds = array<i64: 2>, scalar_prefetch = 0 : i64, scratch_operands = 0 : i64, tpu.core_type = #tpu.core_type<tc>, window_params = [{transform_indices = @transform_0, window_bounds = array<i64: 8, 32>}, {pipeline_mode = #tpu.pipeline_mode<synchronous>, transform_indices = @transform_1, window_bounds = array<i64: 32, 16>}, {pipeline_mode = #tpu.pipeline_mode<synchronous>, transform_indices = @transform_2, window_bounds = array<i64: 1, 16>}, {transform_indices = @transform_3, window_bounds = array<i64: 8, 16>}]} {
    %c0 = arith.constant 0 : index
    %c0_0 = arith.constant 0 : index
    %0 = vector.load %arg1[%c0, %c0_0] : memref<8x32xf32, #tpu.memory_space<vmem>>, vector<8x32xf32>
    %1 = arith.truncf %0 : vector<8x32xf32> to vector<8x32xbf16>
    %c0_1 = arith.constant 0 : index
    %c0_2 = arith.constant 0 : index
    %2 = vector.load %arg2[%c0_1, %c0_2] : memref<32x16xbf16, #tpu.memory_space<vmem>>, vector<32x16xbf16>
    %cst = arith.constant dense<0.000000e+00> : vector<8x16xf32>
    %3 = tpu.matmul %1, %2, %cst {dimension_numbers = #tpu.dot_dimension_numbers<[1], [0], [0], [1], [0, 0, 1, 1], [], []>} : vector<8x32xbf16>, vector<32x16xbf16>, vector<8x16xf32> -> vector<8x16xf32>
    %c0_3 = arith.constant 0 : index
    %c0_4 = arith.constant 0 : index
    %4 = vector.load %arg3[%c0_3, %c0_4] : memref<1x16xf32, #tpu.memory_space<vmem>>, vector<1x16xf32>
    %5 = vector.broadcast %4 : vector<1x16xf32> to vector<8x16xf32>
    %6 = arith.addf %3, %5 : vector<8x16xf32>
    %c0_5 = arith.constant 0 : index
    %c0_6 = arith.constant 0 : index
    %7 = vector.load %arg4[%c0_5, %c0_6] : memref<8x16xf32, #tpu.memory_space<vmem>>, vector<8x16xf32>
    tpu.vector_store %arg4[%c0_5, %c0_6], %6 {strides = array<i32>} : memref<8x16xf32, #tpu.memory_space<vmem>>, vector<8x16xf32>,
    return
  }
  func.func @transform_0(%arg0: i32) -> (i32, i32) {
    %c0_i32 = arith.constant 0 : i32
    %c0_i32_0 = arith.constant 0 : i32
    return %arg0, %c0_i32 : i32, i32
  }
  func.func @transform_1(%arg0: i32) -> (i32, i32) {
    %c0_i32 = arith.constant 0 : i32
    %c0_i32_0 = arith.constant 0 : i32
    %c0_i32_1 = arith.constant 0 : i32
    return %c0_i32, %c0_i32_0 : i32, i32
  }
  func.func @transform_2(%arg0: i32) -> (i32, i32) {
    %c0_i32 = arith.constant 0 : i32
    %c0_i32_0 = arith.constant 0 : i32
    %c0_i32_1 = arith.constant 0 : i32
    return %c0_i32, %c0_i32_0 : i32, i32
  }
  func.func @transform_3(%arg0: i32) -> (i32, i32) {
    %c0_i32 = arith.constant 0 : i32
    %c0_i32_0 = arith.constant 0 : i32
    return %arg0, %c0_i32 : i32, i32
  }
}

</mosaic_0001>

<llo_original>
// kernel: tpu_custom_call.1
$region0: #{tpu_custom_call.1}
  #allocation0 [shape = 'u32[]', space=smem, size = 0x4, offset = 0x4, fixed_abs, tag = 'smem constant byte address 0x4 - core index']
  #allocation1 [shape = 'u32[144,128]{1,0:T(1,128)}', space=vmem, size = 0x12000, scoped, tag = 'internal scratch']
  %s0 = inlined_call_operand.vmem [shape: f32[16,32], index: 0, kind: input, shape index: {}]
  %s1 = inlined_call_operand.vmem [shape: bf16[32,16], index: 1, kind: input, shape index: {}]
  %s2 = inlined_call_operand.vmem [shape: f32[1,16], index: 2, kind: input, shape index: {}]
  %s3 = inlined_call_operand.hbm [shape: f32[16,16], index: 3, kind: output, shape index: {}]
  %s4 = sld [smem:[#allocation0]]
  $region45: #{tpu_custom_call.1} parent=0
    _
  %s6 = ssub.s32 1, %s4
  %s7 = scalar_select 0, %s6, %s4
  $region1: #{tpu_custom_call.1} parent=0
    #allocation2 [shape = 'u8[8192]{0}', space=vmem, size = 0x2000, scoped, tag = 'output window, operand 0']
    #allocation3 [shape = 's32[2]{0}', space=sflag, size = 0x8, scoped, tag = 'scoped memory for tpu_custom_call.1']
    %8 = vsyncpa [#allocation3], 0
    %s9 = scalar_lea.sflag [#allocation3], 1
    %10 = vsyncpa %s9, 0
    loop: start=0, step=1, limit=4
    $region2: #{tpu_custom_call.1} parent=1 // loop_pre_header
      _
    $region3: #{tpu_custom_call.1} parent=1 // loop_header
      %s12 = sphi 0, %s16
      %p13 = scmp.ge.s32.totalorder %s12, 4
      %s22 = sphi 0, %s24
      %s25 = sphi 0, %s22
      %s26 = sphi 0, %s25
      %s42 = sphi 0, %s26
      %s46 = sphi 0, %s46
      %s48 = sphi 0, %s46
      %s49 = sphi 0, %s48
      %s63 = sphi 0, %s49
      %s67 = sphi 0, %s67
      %s69 = sphi 0, %s67
      %s70 = sphi 0, %s69
      %s84 = sphi 0, %s70
      %s90 = sphi 0, %s92
      %s93 = sphi 0, %s90
      %s94 = sphi 0, %s93
      %s110 = sphi 0, %s94
    $region4: #{tpu_custom_call.1} parent=1 // loop_header_branch
      %15 = sbr.rel (%p13) target = $region8
    $region5: #{tpu_custom_call.1} parent=1 // loop_body
      %s17 = ssub.s32 %s12, 1
      %s18 = ssub.s32 %s12, 2
      %s19 = sadd.s32 %s12, 1
      %s20 = ssub.s32 %s12, %s19
      %p21 = scmp.eq.s32.totalorder %s20, 0
      %s23 = sadd.s32 %s22, 1
      %s24 = scalar_select %p21, %s22, %s23
      %p27 = pneg %p21
      %p28 = scmp.eq.s32.totalorder %s12, 1
      %p29 = por %p27, %p28
      %p30 = scmp.ne.s32.totalorder %s22, %s25
      %p31 = scmp.eq.s32.totalorder %s12, 0
      %p32 = por %p30, %p31
      %p33 = scmp.ne.s32.totalorder %s22, %s25
      %p34 = scmp.eq.s32.totalorder %s17, 1
      %p35 = por %p33, %p34
      %p36 = scmp.ne.s32.totalorder %s25, %s26
      %p37 = scmp.eq.s32.totalorder %s17, 0
      %p38 = por %p36, %p37
      %p39 = scmp.ne.s32.totalorder %s25, %s26
      %p40 = scmp.eq.s32.totalorder %s18, 1
      %p41 = por %p39, %p40
      %p43 = scmp.ne.s32.totalorder %s26, %s42
      %p44 = scmp.eq.s32.totalorder %s18, 0
      %p45 = por %p43, %p44
      %s47 = sadd.s32 %s46, 1
      %p50 = scmp.eq.s32.totalorder %s12, 1
      %p51 = scmp.ne.s32.totalorder %s46, %s48
      %p52 = scmp.eq.s32.totalorder %s12, 0
      %p53 = por %p51, %p52
      %p54 = scmp.ne.s32.totalorder %s46, %s48
      %p55 = scmp.eq.s32.totalorder %s17, 1
      %p56 = por %p54, %p55
      %p57 = scmp.ne.s32.totalorder %s48, %s49
      %p58 = scmp.eq.s32.totalorder %s17, 0
      %p59 = por %p57, %p58
      %p60 = scmp.ne.s32.totalorder %s48, %s49
      %p61 = scmp.eq.s32.totalorder %s18, 1
      %p62 = por %p60, %p61
      %p64 = scmp.ne.s32.totalorder %s49, %s63
      %p65 = scmp.eq.s32.totalorder %s18, 0
      %p66 = por %p64, %p65
      %s68 = sadd.s32 %s67, 1
      %p71 = scmp.eq.s32.totalorder %s12, 1
      %p72 = scmp.ne.s32.totalorder %s67, %s69
      %p73 = scmp.eq.s32.totalorder %s12, 0
      %p74 = por %p72, %p73
      %p75 = scmp.ne.s32.totalorder %s67, %s69
      %p76 = scmp.eq.s32.totalorder %s17, 1
      %p77 = por %p75, %p76
      %p78 = scmp.ne.s32.totalorder %s69, %s70
      %p79 = scmp.eq.s32.totalorder %s17, 0
      %p80 = por %p78, %p79
      %p81 = scmp.ne.s32.totalorder %s69, %s70
      %p82 = scmp.eq.s32.totalorder %s18, 1
      %p83 = por %p81, %p82
      %p85 = scmp.ne.s32.totalorder %s70, %s84
      %p86 = scmp.eq.s32.totalorder %s18, 0
      %p87 = por %p85, %p86
      %s88 = ssub.s32 %s12, %s19
      %p89 = scmp.eq.s32.totalorder %s88, 0
      %s91 = sadd.s32 %s90, 1
      %s92 = scalar_select %p89, %s90, %s91
      %p95 = pneg %p89
      %p96 = scmp.eq.s32.totalorder %s12, 1
      %p97 = por %p95, %p96
      %p98 = scmp.ne.s32.totalorder %s90, %s93
      %p99 = scmp.eq.s32.totalorder %s12, 0
      %p100 = por %p98, %p99
      %p101 = scmp.ne.s32.totalorder %s90, %s93
      %p102 = scmp.eq.s32.totalorder %s17, 1
      %p103 = por %p101, %p102
      %p104 = scmp.ne.s32.totalorder %s93, %s94
      %p105 = scmp.eq.s32.totalorder %s17, 0
      %p106 = por %p104, %p105
      %p107 = scmp.ne.s32.totalorder %s93, %s94
      %p108 = scmp.eq.s32.totalorder %s18, 1
      %p109 = por %p107, %p108
      %p111 = scmp.ne.s32.totalorder %s94, %s110
      %p112 = scmp.eq.s32.totalorder %s18, 0
      %p113 = por %p111, %p112
      %p114 = scmp.le.s32.totalorder 1, %s12
      %p115 = scmp.lt.s32.totalorder %s12, 3
      %p116 = pnand %p114, %p115
      %p117 = pneg %p116
      // Predicated region
      $region9: #{tpu_custom_call.1} parent=5 // pred_check
        _
      $region10: #{tpu_custom_call.1} parent=5 // pred_check_branch
        %119 = sbr.rel (%p116) target = $region12
      $region11: #{tpu_custom_call.1} parent=5 // pred_region
        %s120 = ssub.s32 %s12, 1
        // Predicated region
        $region13: #{tpu_custom_call.1} parent=11 // pred_check
          %p121 = pneg %p59
        $region14: #{tpu_custom_call.1} parent=11 // pred_check_branch
          %123 = sbr.rel (%p121) target = $region16
        $region15: #{tpu_custom_call.1} parent=11 // pred_region
          _
        $region16: #{tpu_custom_call.1} parent=11 // pred_fallthru
          _
        // Predicated region
        $region17: #{tpu_custom_call.1} parent=11 // pred_check
          %p124 = pneg %p80
        $region18: #{tpu_custom_call.1} parent=11 // pred_check_branch
          %126 = sbr.rel (%p124) target = $region20
        $region19: #{tpu_custom_call.1} parent=11 // pred_region
          _
        $region20: #{tpu_custom_call.1} parent=11 // pred_fallthru
          _
      $region12: #{tpu_custom_call.1} parent=5 // pred_fallthru
        _
      %p127 = scmp.lt.s32.totalorder %s12, 2
      // Predicated region
      $region21: #{tpu_custom_call.1} parent=5 // pred_check
        %p128 = pneg %p127
      $region22: #{tpu_custom_call.1} parent=5 // pred_check_branch
        %130 = sbr.rel (%p128) target = $region24
      $region23: #{tpu_custom_call.1} parent=5 // pred_region
        // Predicated region
        $region25: #{tpu_custom_call.1} parent=23 // pred_check
          %p131 = pneg %p32
        $region26: #{tpu_custom_call.1} parent=23 // pred_check_branch
          %133 = sbr.rel (%p131) target = $region28
        $region27: #{tpu_custom_call.1} parent=23 // pred_region
          %p134 = scmp.lt.s32.totalorder %s12, 1
          %s135 = scalar_select %p134, %s12, 1
          %s136 = smul.addr %s135, 8
          %s137 = scalar_lea.vmem %s0, %s136
        $region28: #{tpu_custom_call.1} parent=23 // pred_fallthru
          _
      $region24: #{tpu_custom_call.1} parent=5 // pred_fallthru
        _
      %p138 = scmp.le.s32.totalorder 1, %s12
      %p139 = scmp.lt.s32.totalorder %s12, 3
      %p140 = pnand %p138, %p139
      %p141 = pneg %p140
      // Predicated region
      $region29: #{tpu_custom_call.1} parent=5 // pred_check
        _
      $region30: #{tpu_custom_call.1} parent=5 // pred_check_branch
        %143 = sbr.rel (%p140) target = $region32
      $region31: #{tpu_custom_call.1} parent=5 // pred_region
        %s144 = ssub.s32 %s12, 1
        %p145 = scmp.lt.s32.totalorder %s17, 1
        %s146 = scalar_select %p145, %s17, 1
        %s147 = smul.addr %s146, 8
        %s148 = scalar_lea.vmem %s0, %s147
        %p149 = pneg %p38
        %p150 = pneg %p35
        %p151 = pneg %p59
        %p152 = pneg %p56
        %p153 = pneg %p80
        %p154 = pneg %p77
        %p155 = pneg %p106
        %p156 = pneg %p103
        %s157 = sand.u32 %s93, 1
        %s158 = scalar_lea.sflag [#allocation3], %s157
        %s159 = sand.u32 %s93, 1
        %s160 = smul.addr %s159, 8
        %s161 = scalar_lea.vmem [#allocation2], %s160
        %p162 = scmp.lt.s32.totalorder %s17, 1
        %s163 = scalar_select %p162, %s17, 1
        %s164 = smul.addr %s163, 8
        %s165 = scalar_lea.vmem %s0, %s164
        %v167 = vld [vmem:[%s165] sm:$0xff]
        %v168 = vpack.c.bf16 %v167, %v167
        %v169 = vld [vmem:[%s1] sm:$0xf]
        %v170 = vld [vmem:[%s1 + $0x4] sm:$0xf]
        %v171 = vld [vmem:[%s1 + $0x8] sm:$0xf]
        %v172 = vld [vmem:[%s1 + $0xc] sm:$0xf]
        %v173 = vld [vmem:[%s2] sm:$0x1]
        %v175 = vlaneseq
        %v176 = vshrl.u32 %v175, 7
        %v177 = vsub.s32 0, %v176
        %v178 = vrot.slane %v173, %v177
        %v184 = vunpack.c.l.b16 %v169
        %v185 = vunpack.c.l.b16 %v170
        %v186 = vunpack.c.l.b16 %v171
        %v187 = vunpack.c.l.b16 %v172
        %v188 = vpack.c.b16 %v185, %v184
        %v189 = vpack.c.b16 %v187, %v186
        %vm192 = vcmask 261120
        %v194 = vsel %vm192, %v168, 0
        %196 = vmatprep.subr.bf16.mxu0 0
        %197 = vmatpush1.bf16.msra.mxu0 %v188
        %198 = vmatprep.subr.bf16.mxu0 0
        %199 = vmatpush1.bf16.msra.mxu0 %v189
        %200 = vmatprep.subr.bf16.mxu0 0
        %201 = vmatpush1.bf16.msra.mxu0 0
        %202 = vmatprep.subr.bf16.mxu0 0
        %203 = vmatpush1.bf16.msra.mxu0 0
        %204 = vmatprep.subr.bf16.mxu0 0
        %205 = vmatpush1.bf16.msra.mxu0 0
        %206 = vmatprep.subr.bf16.mxu0 0
        %207 = vmatpush1.bf16.msra.mxu0 0
        %208 = vmatprep.subr.bf16.mxu0 0
        %209 = vmatpush1.bf16.msra.mxu0 0
        %210 = vmatprep.subr.bf16.mxu0 0
        %211 = vmatpush1.bf16.msra.mxu0 0
        %212 = vmatprep.subr.bf16.mxu0 0
        %213 = vmatpush1.bf16.msra.mxu0 0
        %214 = vmatprep.subr.bf16.mxu0 0
        %215 = vmatpush1.bf16.msra.mxu0 0
        %216 = vmatprep.subr.bf16.mxu0 0
        %217 = vmatpush1.bf16.msra.mxu0 0
        %218 = vmatprep.subr.bf16.mxu0 0
        %219 = vmatpush1.bf16.msra.mxu0 0
        %220 = vmatprep.subr.bf16.mxu0 0
        %221 = vmatpush1.bf16.msra.mxu0 0
        %222 = vmatprep.subr.bf16.mxu0 0
        %223 = vmatpush1.bf16.msra.mxu0 0
        %224 = vmatprep.subr.bf16.mxu0 0
        %225 = vmatpush1.bf16.msra.mxu0 0
        %226 = vmatprep.subr.bf16.mxu0 0
        %227 = vmatpush1.bf16.msra.mxu0 0
        %228 = vmatprep.mubr.bf16.mxu0 0
        %229 = vmatmul.mubr.bf16.gmra.mrb[0].mxu0 %v194
        %v230 = vpop.f32.mrb[0].mxu0
        %v231 = vadd.f32 %v178, %v230
        %v232 = vpop.f32.mrb[0].mxu0
        %v233 = vpop.f32.mrb[0].mxu0
        %v234 = vpop.f32.mrb[0].mxu0
        %235 = vdwg.mxu0
        %vm236 = vcmask 130048
        %237 = vst.msk [vmem:[%s161] sm:$0xff] %vm236, %v231
        %s238 = sand.u32 %s93, 1
        %s239 = scalar_lea.sflag [#allocation3], %s238
        %s240 = sand.u32 %s93, 1
        %s241 = smul.addr %s240, 8
        %s242 = scalar_lea.vmem [#allocation2], %s241
        // Predicated region
        $region33: #{tpu_custom_call.1} parent=31 // pred_check
          %p243 = pneg %p103
        $region34: #{tpu_custom_call.1} parent=31 // pred_check_branch
          %245 = sbr.rel (%p243) target = $region36
        $region35: #{tpu_custom_call.1} parent=31 // pred_region
          %s247 = ssub.s32 128, 128
          %248 = vsyncadd %s239, %s247
          %s249 = smul.addr %s17, 128
          %s250 = scalar_lea.hbm %s3, %s249
          %s252 = sshll.u32 %s242, 4
          %s253 = int_to_ptr.vmem [resolvable:$true] %s252
          %255 = dma.vmem_to_hbm [thread:$0]  %s253, 128, %s250, %s239
        $region36: #{tpu_custom_call.1} parent=31 // pred_fallthru
          _
      $region32: #{tpu_custom_call.1} parent=5 // pred_fallthru
        _
      %p256 = scmp.le.s32.totalorder 2, %s12
      // Predicated region
      $region37: #{tpu_custom_call.1} parent=5 // pred_check
        %p257 = pneg %p256
      $region38: #{tpu_custom_call.1} parent=5 // pred_check_branch
        %259 = sbr.rel (%p257) target = $region40
      $region39: #{tpu_custom_call.1} parent=5 // pred_region
        %s260 = ssub.s32 %s12, 2
        // Predicated region
        $region41: #{tpu_custom_call.1} parent=39 // pred_check
          %p261 = pneg %p109
        $region42: #{tpu_custom_call.1} parent=39 // pred_check_branch
          %263 = sbr.rel (%p261) target = $region44
        $region43: #{tpu_custom_call.1} parent=39 // pred_region
          %s264 = sand.u32 %s94, 1
          %s265 = scalar_lea.sflag [#allocation3], %s264
          %s266 = sand.u32 %s94, 1
          %s267 = smul.addr %s266, 8
          %s268 = scalar_lea.vmem [#allocation2], %s267
          %269 = dma.done %s265, 128
        $region44: #{tpu_custom_call.1} parent=39 // pred_fallthru
          _
      $region40: #{tpu_custom_call.1} parent=5 // pred_fallthru
        _
    $region6: #{tpu_custom_call.1} parent=1 // loop_footer
      %s16 = sadd.s32 1, %s12
    $region7: #{tpu_custom_call.1} parent=1 // loop_footer_branch
      %11 = sbr.rel target = $region3
    $region8: #{tpu_custom_call.1} parent=1 // loop_exit
      _
    %270 = vsyncpa [#allocation3], 1
    %s271 = scalar_lea.sflag [#allocation3], 1
    %272 = vsyncpa %s271, 1

</llo_original>
